<compile_context>
chip_gen: v5e
topology: v5e:2x2
jax: 0.10.0
libtpu: 0.0.40
codegen_flags: <defaults>
</compile_context>

<pallas_src>
import jax
import jax.numpy as jnp
from jax import lax
from jax.experimental import pallas as pl
from jax.experimental.pallas import tpu as pltpu

_EPS = 1e-6
_LANES = 128
_SUBLANES = 8
_NUM_SLICES = 2          # leading "parallel" grid axis (both TCs on v7x)
_BLOCK_ROWS = 4096       # 4096 * 128 * 4 B = 2 MiB per f32 input block


def _round_up(x, m):
    return ((x + m - 1) // m) * m


def _make_dice_kernel(rows, block_rows, need_mask):
    def kernel(p_ref, t_ref, out_ref):
        c = pl.program_id(0)           # parallel slice (TensorCore on v7x)
        i = pl.program_id(1)           # reduction step within the slice

        @pl.when(i == 0)
        def _init():
            out_ref[...] = jnp.zeros_like(out_ref)

        p = p_ref[...].astype(jnp.float32)
        t = t_ref[...].astype(jnp.float32)

        if need_mask:
            # Zero out rows past the logical end of the array (overhanging
            # last block and fully-phantom trailing blocks).
            start = (c * pl.num_programs(1) + i) * block_rows
            row = lax.broadcasted_iota(jnp.int32, p.shape, 0) + start
            valid = row < rows
            zero = jnp.float32(0.0)
            p = jnp.where(valid, p, zero)
            t = jnp.where(valid, t, zero)

        # Partial reduction of the block to an (8,128) tile: pure VPU adds
        # across vregs (no per-step XLU full-reduce, no scalar round trip).
        pt = jnp.sum((p * t).reshape(-1, _SUBLANES, _LANES), axis=0)
        s = jnp.sum((p + t).reshape(-1, _SUBLANES, _LANES), axis=0)
        out_ref[0, 0] += pt            # running sum(p * t)
        out_ref[0, 1] += s             # running sum(p) + sum(t)

    return kernel


def dice_loss(preds, targets, *, block_rows=_BLOCK_ROWS):
    """Soft Dice loss.  preds/targets: arrays of identical shape (e.g. NCHW)."""
    assert preds.shape == targets.shape
    total = preds.size

    p_flat = preds.reshape(-1)
    t_flat = targets.reshape(-1)
    pad = (-total) % _LANES
    if pad:
        # TODO(synk): rare path (size not a multiple of 128) still makes a tiny
        # zero-padded copy; zeros do not change either running sum.
        p_flat = jnp.pad(p_flat, (0, pad))
        t_flat = jnp.pad(t_flat, (0, pad))
    rows = (total + pad) // _LANES
    p2 = p_flat.reshape(rows, _LANES)   # contiguous reshape: no HBM copy
    t2 = t_flat.reshape(rows, _LANES)

    block_rows = max(_SUBLANES, (block_rows // _SUBLANES) * _SUBLANES)
    block_rows = min(block_rows, _round_up(rows, _SUBLANES))
    n_blocks = pl.cdiv(rows, block_rows)
    steps = pl.cdiv(n_blocks, _NUM_SLICES)
    # Mask only when the grid covers more rows than the array actually has.
    need_mask = _NUM_SLICES * steps * block_rows != rows

    def in_map(c, i):
        # Phantom trailing blocks (fully masked inside the kernel) are clamped
        # so their DMA stays within the array.
        return (jnp.minimum(c * steps + i, n_blocks - 1), 0)

    partials = pl.pallas_call(
        _make_dice_kernel(rows, block_rows, need_mask),
        out_shape=jax.ShapeDtypeStruct(
            (_NUM_SLICES, 2, _SUBLANES, _LANES), jnp.float32),
        grid_spec=pltpu.PrefetchScalarGridSpec(
            num_scalar_prefetch=0,
            grid=(_NUM_SLICES, steps),
            in_specs=[
                pl.BlockSpec((block_rows, _LANES), in_map),
                pl.BlockSpec((block_rows, _LANES), in_map),
            ],
            out_specs=pl.BlockSpec(
                (1, 2, _SUBLANES, _LANES), lambda c, i: (c, 0, 0, 0)),
        ),
        compiler_params=pltpu.CompilerParams(
            dimension_semantics=("parallel", "arbitrary"),
        ),
    )(p2, t2)

    # Final cross-core / cross-lane reduce + dice formula (tiny, done in JAX).
    sums = jnp.sum(partials, axis=(0, 2, 3))      # [sum(p*t), sum(p)+sum(t)]
    dice = (2.0 * sums[0] + _EPS) / (sums[1] + _EPS)
    return 1.0 - dice


def _dice_loss_ref(preds, targets):
    p = preds.astype(jnp.float32).reshape(-1)
    t = targets.astype(jnp.float32).reshape(-1)
    inter = jnp.sum(p * t)
    denom = jnp.sum(p) + jnp.sum(t)
    return 1.0 - (2.0 * inter + _EPS) / (denom + _EPS)


if __name__ == "__main__":
    key = jax.random.PRNGKey(0)
    k1, k2 = jax.random.split(key)

    # NCHW inputs: sigmoid probabilities vs. binary masks.
    preds = jax.nn.sigmoid(jax.random.normal(k1, (2, 4, 16, 16), jnp.float32))
    targets = (jax.random.uniform(k2, (2, 4, 16, 16)) > 0.5).astype(jnp.float32)
    loss = dice_loss(preds, targets)
    jax.block_until_ready(loss)
    ref = _dice_loss_ref(preds, targets)
    assert jnp.allclose(loss, ref, rtol=1e-5, atol=1e-5), (loss, ref)

    # Ragged total size (not a multiple of 128): exercises the lane-pad path.
    k3, k4 = jax.random.split(k1)
    p2 = jax.nn.sigmoid(jax.random.normal(k3, (2, 3, 17, 19), jnp.float32))
    t2 = (jax.random.uniform(k4, (2, 3, 17, 19)) > 0.5).astype(jnp.float32)
    l2 = dice_loss(p2, t2)
    jax.block_until_ready(l2)
    assert jnp.allclose(l2, _dice_loss_ref(p2, t2), rtol=1e-5, atol=1e-5)

    # Multi-block + phantom-tail path (small block_rows forces several steps).
    k5, k6 = jax.random.split(k2)
    p3 = jax.nn.sigmoid(jax.random.normal(k5, (2, 4, 64, 64), jnp.float32))
    t3 = (jax.random.uniform(k6, (2, 4, 64, 64)) > 0.5).astype(jnp.float32)
    l3 = dice_loss(p3, t3, block_rows=96)
    jax.block_until_ready(l3)
    assert jnp.allclose(l3, _dice_loss_ref(p3, t3), rtol=1e-5, atol=1e-5)

    print("KERNEL_OK")
</pallas_src>

<mosaic_0001>
module attributes {stable_mosaic.version = 11 : i64} {
  func.func @kernel(%arg0: i32, %arg1: i32, %arg2: memref<16x128xf32, #tpu.memory_space<vmem>>, %arg3: memref<16x128xf32, #tpu.memory_space<vmem>>, %arg4: memref<1x2x8x128xf32, #tpu.memory_space<vmem>>) attributes {dimension_semantics = [#tpu.dimension_semantics<parallel>, #tpu.dimension_semantics<arbitrary>], iteration_bounds = array<i64: 2, 1>, scalar_prefetch = 0 : i64, scratch_operands = 0 : i64, tpu.core_type = #tpu.core_type<tc>, window_params = [{transform_indices = @transform_0, window_bounds = array<i64: 16, 128>}, {transform_indices = @transform_1, window_bounds = array<i64: 16, 128>}, {transform_indices = @transform_2, window_bounds = array<i64: 1, 2, 8, 128>}]} {
    %c0_i32 = arith.constant 0 : i32
    %0 = arith.cmpi eq, %arg1, %c0_i32 : i32
    %1 = arith.extui %0 : i1 to i32
    %c0_i32_0 = arith.constant 0 : i32
    %2 = arith.cmpi ne, %1, %c0_i32_0 : i32
    scf.if %2 {
      %cst_23 = arith.constant 0.000000e+00 : f32
      %35 = vector.broadcast %cst_23 : f32 to vector<1x2x8x128xf32>
      %c0_24 = arith.constant 0 : index
      %c0_25 = arith.constant 0 : index
      %c0_26 = arith.constant 0 : index
      %c0_27 = arith.constant 0 : index
      %36 = vector.load %arg4[%c0_24, %c0_25, %c0_26, %c0_27] : memref<1x2x8x128xf32, #tpu.memory_space<vmem>>, vector<1x2x8x128xf32>
      tpu.vector_store %arg4[%c0_24, %c0_25, %c0_26, %c0_27], %35 {strides = array<i32>} : memref<1x2x8x128xf32, #tpu.memory_space<vmem>>, vector<1x2x8x128xf32>,
    } else {
    }
    %c0 = arith.constant 0 : index
    %c0_1 = arith.constant 0 : index
    %3 = vector.load %arg2[%c0, %c0_1] : memref<16x128xf32, #tpu.memory_space<vmem>>, vector<16x128xf32>
    %c0_2 = arith.constant 0 : index
    %c0_3 = arith.constant 0 : index
    %4 = vector.load %arg3[%c0_2, %c0_3] : memref<16x128xf32, #tpu.memory_space<vmem>>, vector<16x128xf32>
    %c1_i32 = arith.constant 1 : i32
    %5 = arith.muli %arg0, %c1_i32 : i32
    %6 = arith.addi %5, %arg1 : i32
    %c16_i32 = arith.constant 16 : i32
    %7 = arith.muli %6, %c16_i32 : i32
    %8 = tpu.iota {dimensions = array<i32: 0>} : vector<16x128xi32>
    %9 = vector.broadcast %7 : i32 to vector<16x128xi32>
    %10 = arith.addi %8, %9 : vector<16x128xi32>
    %c16_i32_4 = arith.constant 16 : i32
    %11 = vector.broadcast %c16_i32_4 : i32 to vector<16x128xi32>
    %12 = arith.cmpi slt, %10, %11 : vector<16x128xi32>
    %cst = arith.constant 0.000000e+00 : f32
    %13 = vector.broadcast %cst : f32 to vector<16x128xf32>
    %14 = arith.select %12, %3, %13 : vector<16x128xi1>, vector<16x128xf32>
    %cst_5 = arith.constant 0.000000e+00 : f32
    %15 = vector.broadcast %cst_5 : f32 to vector<16x128xf32>
    %16 = arith.select %12, %4, %15 : vector<16x128xi1>, vector<16x128xf32>
    %17 = arith.mulf %14, %16 : vector<16x128xf32>
    %18 = vector.shape_cast %17 : vector<16x128xf32> to vector<2x8x128xf32>
    %cst_6 = arith.constant dense<0.000000e+00> : vector<8x128xf32>
    %19 = vector.multi_reduction <add>, %18, %cst_6 [0] : vector<2x8x128xf32> to vector<8x128xf32>
    %20 = arith.addf %14, %16 : vector<16x128xf32>
    %21 = vector.shape_cast %20 : vector<16x128xf32> to vector<2x8x128xf32>
    %cst_7 = arith.constant dense<0.000000e+00> : vector<8x128xf32>
    %22 = vector.multi_reduction <add>, %21, %cst_7 [0] : vector<2x8x128xf32> to vector<8x128xf32>
    %c0_8 = arith.constant 0 : index
    %c0_9 = arith.constant 0 : index
    %c0_10 = arith.constant 0 : index
    %c0_11 = arith.constant 0 : index
    %23 = vector.load %arg4[%c0_8, %c0_9, %c0_10, %c0_11] : memref<1x2x8x128xf32, #tpu.memory_space<vmem>>, vector<1x1x8x128xf32>
    %24 = vector.shape_cast %23 : vector<1x1x8x128xf32> to vector<8x128xf32>
    %25 = arith.addf %24, %19 : vector<8x128xf32>
    %c0_12 = arith.constant 0 : index
    %c0_13 = arith.constant 0 : index
    %c0_14 = arith.constant 0 : index
    %c0_15 = arith.constant 0 : index
    %26 = vector.load %arg4[%c0_12, %c0_13, %c0_14, %c0_15] : memref<1x2x8x128xf32, #tpu.memory_space<vmem>>, vector<1x1x8x128xf32>
    %27 = vector.shape_cast %26 : vector<1x1x8x128xf32> to vector<8x128xf32>
    %28 = vector.shape_cast %25 : vector<8x128xf32> to vector<1x1x8x128xf32>
    tpu.vector_store %arg4[%c0_12, %c0_13, %c0_14, %c0_15], %28 {strides = array<i32>} : memref<1x2x8x128xf32, #tpu.memory_space<vmem>>, vector<1x1x8x128xf32>,
    %c0_16 = arith.constant 0 : index
    %c1 = arith.constant 1 : index
    %c0_17 = arith.constant 0 : index
    %c0_18 = arith.constant 0 : index
    %29 = vector.load %arg4[%c0_16, %c1, %c0_17, %c0_18] : memref<1x2x8x128xf32, #tpu.memory_space<vmem>>, vector<1x1x8x128xf32>
    %30 = vector.shape_cast %29 : vector<1x1x8x128xf32> to vector<8x128xf32>
    %31 = arith.addf %30, %22 : vector<8x128xf32>
    %c0_19 = arith.constant 0 : index
    %c1_20 = arith.constant 1 : index
    %c0_21 = arith.constant 0 : index
    %c0_22 = arith.constant 0 : index
    %32 = vector.load %arg4[%c0_19, %c1_20, %c0_21, %c0_22] : memref<1x2x8x128xf32, #tpu.memory_space<vmem>>, vector<1x1x8x128xf32>
    %33 = vector.shape_cast %32 : vector<1x1x8x128xf32> to vector<8x128xf32>
    %34 = vector.shape_cast %31 : vector<8x128xf32> to vector<1x1x8x128xf32>
    tpu.vector_store %arg4[%c0_19, %c1_20, %c0_21, %c0_22], %34 {strides = array<i32>} : memref<1x2x8x128xf32, #tpu.memory_space<vmem>>, vector<1x1x8x128xf32>,
    return
  }
  func.func @transform_0(%arg0: i32, %arg1: i32) -> (i32, i32) {
    %c1_i32 = arith.constant 1 : i32
    %0 = arith.muli %arg0, %c1_i32 : i32
    %1 = arith.addi %0, %arg1 : i32
    %c0_i32 = arith.constant 0 : i32
    %2 = arith.minsi %1, %c0_i32 : i32
    %c0_i32_0 = arith.constant 0 : i32
    %c0_i32_1 = arith.constant 0 : i32
    return %2, %c0_i32_0 : i32, i32
  }
  func.func @transform_1(%arg0: i32, %arg1: i32) -> (i32, i32) {
    %c1_i32 = arith.constant 1 : i32
    %0 = arith.muli %arg0, %c1_i32 : i32
    %1 = arith.addi %0, %arg1 : i32
    %c0_i32 = arith.constant 0 : i32
    %2 = arith.minsi %1, %c0_i32 : i32
    %c0_i32_0 = arith.constant 0 : i32
    %c0_i32_1 = arith.constant 0 : i32
    return %2, %c0_i32_0 : i32, i32
  }
  func.func @transform_2(%arg0: i32, %arg1: i32) -> (i32, i32, i32, i32) {
    %c0_i32 = arith.constant 0 : i32
    %c0_i32_0 = arith.constant 0 : i32
    %c0_i32_1 = arith.constant 0 : i32
    %c0_i32_2 = arith.constant 0 : i32
    return %arg0, %c0_i32, %c0_i32_0, %c0_i32_1 : i32, i32, i32, i32
  }
}

</mosaic_0001>

<llo_original>
// kernel: tpu_custom_call.1
$region0: #{tpu_custom_call.1}
  #allocation0 [shape = 'u32[]', space=smem, size = 0x4, offset = 0x4, fixed_abs, tag = 'smem constant byte address 0x4 - core index']
  #allocation1 [shape = 'u32[72,128]{1,0:T(1,128)}', space=vmem, size = 0x9000, scoped, tag = 'internal scratch']
  %s0 = inlined_call_operand.hbm [shape: f32[16,128], index: 0, kind: input, shape index: {}]
  %s1 = inlined_call_operand.hbm [shape: f32[16,128], index: 1, kind: input, shape index: {}]
  %s2 = inlined_call_operand.hbm [shape: f32[2,2,8,128], index: 2, kind: output, shape index: {}]
  %s3 = sld [smem:[#allocation0]]
  $region53: #{tpu_custom_call.1} parent=0
    _
  %s5 = ssub.s32 1, %s3
  %s6 = scalar_select 0, %s5, %s3
  $region1: #{tpu_custom_call.1} parent=0
    #allocation2 [shape = 'u8[16384]{0}', space=vmem, size = 0x4000, scoped, tag = 'input window, operand 0']
    #allocation3 [shape = 's32[2]{0}', space=sflag, size = 0x8, scoped, tag = 'scoped memory for tpu_custom_call.1']
    #allocation4 [shape = 's32[2]{0}', space=sflag, size = 0x8, scoped, tag = 'scoped memory for tpu_custom_call.1']
    #allocation5 [shape = 'u8[16384]{0}', space=vmem, size = 0x4000, scoped, tag = 'input window, operand 1']
    #allocation6 [shape = 's32[2]{0}', space=sflag, size = 0x8, scoped, tag = 'scoped memory for tpu_custom_call.1']
    #allocation7 [shape = 'u8[16384]{0}', space=vmem, size = 0x4000, scoped, tag = 'output window, operand 0']
    %7 = vsyncpa [#allocation3], 0
    %s8 = scalar_lea.sflag [#allocation3], 1
    %9 = vsyncpa %s8, 0
    %10 = vsyncpa [#allocation6], 0
    %s11 = scalar_lea.sflag [#allocation6], 1
    %12 = vsyncpa %s11, 0
    %13 = vsyncpa [#allocation4], 0
    %s14 = scalar_lea.sflag [#allocation4], 1
    %15 = vsyncpa %s14, 0
    loop: start=0, step=1, limit=4
    $region2: #{tpu_custom_call.1} parent=1 // loop_pre_header
      _
    $region3: #{tpu_custom_call.1} parent=1 // loop_header
      %s17 = sphi 0, %s21
      %p18 = scmp.ge.s32.totalorder %s17, 4
      %s24 = sphi 0, %s36
      %s25 = sphi 0, %s32
      %s26 = sphi 0, %s24
      %s27 = sphi 0, %s25
      %s28 = sphi 0, %s26
      %s29 = sphi 0, %s27
      %s45 = sphi 0, %s47
      %s48 = sphi 0, %s45
      %s49 = sphi 0, %s48
      %s65 = sphi 0, %s49
      %s77 = sphi 0, %s79
      %s80 = sphi 0, %s77
      %s81 = sphi 0, %s80
      %s97 = sphi 0, %s81
      %s103 = sphi 0, %s105
      %s106 = sphi 0, %s103
      %s107 = sphi 0, %s106
      %s123 = sphi 0, %s107
    $region4: #{tpu_custom_call.1} parent=1 // loop_header_branch
      %20 = sbr.rel (%p18) target = $region8
    $region5: #{tpu_custom_call.1} parent=1 // loop_body
      %s22 = ssub.s32 %s17, 1
      %s23 = ssub.s32 %s17, 2
      %s30 = sadd.s32 1, %s25
      %p31 = scmp.ge.s32.totalorder %s30, 1
      %s32 = scalar_select %p31, 0, %s30
      %s33 = sadd.s32 1, %s24
      %s34 = scalar_select %p31, %s33, %s24
      %p35 = scmp.ge.s32.totalorder %s34, 2
      %s36 = scalar_select %p35, 0, %s34
      %s37 = sadd.s32 %s24, %s25
      %p38 = scmp.lt.s32.totalorder %s37, 0
      %s39 = scalar_select %p38, %s37, 0
      %s40 = sadd.s32 %s36, %s32
      %p41 = scmp.lt.s32.totalorder %s40, 0
      %s42 = scalar_select %p41, %s40, 0
      %s43 = ssub.s32 %s39, %s42
      %p44 = scmp.eq.s32.totalorder %s43, 0
      %s46 = sadd.s32 %s45, 1
      %s47 = scalar_select %p44, %s45, %s46
      %p50 = pneg %p44
      %p51 = scmp.eq.s32.totalorder %s17, 1
      %p52 = por %p50, %p51
      %p53 = scmp.ne.s32.totalorder %s45, %s48
      %p54 = scmp.eq.s32.totalorder %s17, 0
      %p55 = por %p53, %p54
      %p56 = scmp.ne.s32.totalorder %s45, %s48
      %p57 = scmp.eq.s32.totalorder %s22, 1
      %p58 = por %p56, %p57
      %p59 = scmp.ne.s32.totalorder %s48, %s49
      %p60 = scmp.eq.s32.totalorder %s22, 0
      %p61 = por %p59, %p60
      %p62 = scmp.ne.s32.totalorder %s48, %s49
      %p63 = scmp.eq.s32.totalorder %s23, 1
      %p64 = por %p62, %p63
      %p66 = scmp.ne.s32.totalorder %s49, %s65
      %p67 = scmp.eq.s32.totalorder %s23, 0
      %p68 = por %p66, %p67
      %s69 = sadd.s32 %s24, %s25
      %p70 = scmp.lt.s32.totalorder %s69, 0
      %s71 = scalar_select %p70, %s69, 0
      %s72 = sadd.s32 %s36, %s32
      %p73 = scmp.lt.s32.totalorder %s72, 0
      %s74 = scalar_select %p73, %s72, 0
      %s75 = ssub.s32 %s71, %s74
      %p76 = scmp.eq.s32.totalorder %s75, 0
      %s78 = sadd.s32 %s77, 1
      %s79 = scalar_select %p76, %s77, %s78
      %p82 = pneg %p76
      %p83 = scmp.eq.s32.totalorder %s17, 1
      %p84 = por %p82, %p83
      %p85 = scmp.ne.s32.totalorder %s77, %s80
      %p86 = scmp.eq.s32.totalorder %s17, 0
      %p87 = por %p85, %p86
      %p88 = scmp.ne.s32.totalorder %s77, %s80
      %p89 = scmp.eq.s32.totalorder %s22, 1
      %p90 = por %p88, %p89
      %p91 = scmp.ne.s32.totalorder %s80, %s81
      %p92 = scmp.eq.s32.totalorder %s22, 0
      %p93 = por %p91, %p92
      %p94 = scmp.ne.s32.totalorder %s80, %s81
      %p95 = scmp.eq.s32.totalorder %s23, 1
      %p96 = por %p94, %p95
      %p98 = scmp.ne.s32.totalorder %s81, %s97
      %p99 = scmp.eq.s32.totalorder %s23, 0
      %p100 = por %p98, %p99
      %s101 = ssub.s32 %s24, %s36
      %p102 = scmp.eq.s32.totalorder %s101, 0
      %s104 = sadd.s32 %s103, 1
      %s105 = scalar_select %p102, %s103, %s104
      %p108 = pneg %p102
      %p109 = scmp.eq.s32.totalorder %s17, 1
      %p110 = por %p108, %p109
      %p111 = scmp.ne.s32.totalorder %s103, %s106
      %p112 = scmp.eq.s32.totalorder %s17, 0
      %p113 = por %p111, %p112
      %p114 = scmp.ne.s32.totalorder %s103, %s106
      %p115 = scmp.eq.s32.totalorder %s22, 1
      %p116 = por %p114, %p115
      %p117 = scmp.ne.s32.totalorder %s106, %s107
      %p118 = scmp.eq.s32.totalorder %s22, 0
      %p119 = por %p117, %p118
      %p120 = scmp.ne.s32.totalorder %s106, %s107
      %p121 = scmp.eq.s32.totalorder %s23, 1
      %p122 = por %p120, %p121
      %p124 = scmp.ne.s32.totalorder %s107, %s123
      %p125 = scmp.eq.s32.totalorder %s23, 0
      %p126 = por %p124, %p125
      %p127 = scmp.le.s32.totalorder 1, %s17
      %p128 = scmp.lt.s32.totalorder %s17, 3
      %p129 = pnand %p127, %p128
      %p130 = pneg %p129
      // Predicated region
      $region9: #{tpu_custom_call.1} parent=5 // pred_check
        _
      $region10: #{tpu_custom_call.1} parent=5 // pred_check_branch
        %132 = sbr.rel (%p129) target = $region12
      $region11: #{tpu_custom_call.1} parent=5 // pred_region
        %s133 = ssub.s32 %s17, 1
      $region12: #{tpu_custom_call.1} parent=5 // pred_fallthru
        _
      %p134 = scmp.lt.s32.totalorder %s17, 2
      // Predicated region
      $region13: #{tpu_custom_call.1} parent=5 // pred_check
        %p135 = pneg %p134
      $region14: #{tpu_custom_call.1} parent=5 // pred_check_branch
        %137 = sbr.rel (%p135) target = $region16
      $region15: #{tpu_custom_call.1} parent=5 // pred_region
        // Predicated region
        $region17: #{tpu_custom_call.1} parent=15 // pred_check
          %p138 = pneg %p55
        $region18: #{tpu_custom_call.1} parent=15 // pred_check_branch
          %140 = sbr.rel (%p138) target = $region20
        $region19: #{tpu_custom_call.1} parent=15 // pred_region
          %s141 = sand.u32 %s45, 1
          %s142 = scalar_lea.sflag [#allocation3], %s141
          %s143 = sand.u32 %s45, 1
          %s144 = smul.addr %s143, 16
          %s145 = scalar_lea.vmem [#allocation2], %s144
          %s146 = sadd.s32 %s24, %s25
          %p147 = scmp.lt.s32.totalorder %s146, 0
          %s148 = scalar_select %p147, %s146, 0
          %s149 = smul.u32 2, %s148
          %151 = vsyncadd %s142, 0
          %s152 = smul.addr %s149, 8
          %s153 = scalar_lea.hbm %s0, %s152
          %s154 = sshll.u32 %s153, 4
          %s155 = int_to_ptr.hbm [resolvable:$true] %s154
          %s156 = sshll.u32 %s145, 4
          %s157 = int_to_ptr.vmem [resolvable:$true] %s156
          %162 = dma.hbm_to_vmem [thread:$0]  %s155, 256, %s157, %s142, 128, 128, 8
        $region20: #{tpu_custom_call.1} parent=15 // pred_fallthru
          _
        // Predicated region
        $region21: #{tpu_custom_call.1} parent=15 // pred_check
          %p163 = pneg %p87
        $region22: #{tpu_custom_call.1} parent=15 // pred_check_branch
          %165 = sbr.rel (%p163) target = $region24
        $region23: #{tpu_custom_call.1} parent=15 // pred_region
          %s166 = sand.u32 %s77, 1
          %s167 = scalar_lea.sflag [#allocation6], %s166
          %s168 = sand.u32 %s77, 1
          %s169 = smul.addr %s168, 16
          %s170 = scalar_lea.vmem [#allocation5], %s169
          %s171 = sadd.s32 %s24, %s25
          %p172 = scmp.lt.s32.totalorder %s171, 0
          %s173 = scalar_select %p172, %s171, 0
          %s174 = smul.u32 2, %s173
          %176 = vsyncadd %s167, 0
          %s177 = smul.addr %s174, 8
          %s178 = scalar_lea.hbm %s1, %s177
          %s179 = sshll.u32 %s178, 4
          %s180 = int_to_ptr.hbm [resolvable:$true] %s179
          %s181 = sshll.u32 %s170, 4
          %s182 = int_to_ptr.vmem [resolvable:$true] %s181
          %187 = dma.hbm_to_vmem [thread:$0]  %s180, 256, %s182, %s167, 128, 128, 8
        $region24: #{tpu_custom_call.1} parent=15 // pred_fallthru
          _
      $region16: #{tpu_custom_call.1} parent=5 // pred_fallthru
        _
      %p188 = scmp.le.s32.totalorder 1, %s17
      %p189 = scmp.lt.s32.totalorder %s17, 3
      %p190 = pnand %p188, %p189
      %p191 = pneg %p190
      // Predicated region
      $region25: #{tpu_custom_call.1} parent=5 // pred_check
        _
      $region26: #{tpu_custom_call.1} parent=5 // pred_check_branch
        %193 = sbr.rel (%p190) target = $region28
      $region27: #{tpu_custom_call.1} parent=5 // pred_region
        %s194 = ssub.s32 %s17, 1
        %s195 = sand.u32 %s48, 1
        %s196 = scalar_lea.sflag [#allocation3], %s195
        %s197 = sand.u32 %s48, 1
        %s198 = smul.addr %s197, 16
        %s199 = scalar_lea.vmem [#allocation2], %s198
        // Predicated region
        $region29: #{tpu_custom_call.1} parent=27 // pred_check
          %p200 = pneg %p61
        $region30: #{tpu_custom_call.1} parent=27 // pred_check_branch
          %202 = sbr.rel (%p200) target = $region32
        $region31: #{tpu_custom_call.1} parent=27 // pred_region
          %204 = dma.done %s196, 256
        $region32: #{tpu_custom_call.1} parent=27 // pred_fallthru
          _
        %s205 = sand.u32 %s80, 1
        %s206 = scalar_lea.sflag [#allocation6], %s205
        %s207 = sand.u32 %s80, 1
        %s208 = smul.addr %s207, 16
        %s209 = scalar_lea.vmem [#allocation5], %s208
        // Predicated region
        $region33: #{tpu_custom_call.1} parent=27 // pred_check
          %p210 = pneg %p93
        $region34: #{tpu_custom_call.1} parent=27 // pred_check_branch
          %212 = sbr.rel (%p210) target = $region36
        $region35: #{tpu_custom_call.1} parent=27 // pred_region
          %214 = dma.done %s206, 256
        $region36: #{tpu_custom_call.1} parent=27 // pred_fallthru
          _
        %s215 = sand.u32 %s48, 1
        %s216 = scalar_lea.sflag [#allocation3], %s215
        %s217 = sand.u32 %s48, 1
        %s218 = smul.addr %s217, 16
        %s219 = scalar_lea.vmem [#allocation2], %s218
        %p220 = pneg %p61
        %p221 = pneg %p58
        %s222 = sand.u32 %s80, 1
        %s223 = scalar_lea.sflag [#allocation6], %s222
        %s224 = sand.u32 %s80, 1
        %s225 = smul.addr %s224, 16
        %s226 = scalar_lea.vmem [#allocation5], %s225
        %p227 = pneg %p93
        %p228 = pneg %p90
        %p229 = pneg %p119
        %p230 = pneg %p116
        %s231 = sand.u32 %s106, 1
        %s232 = scalar_lea.sflag [#allocation4], %s231
        %s233 = sand.u32 %s106, 1
        %s234 = smul.addr %s233, 16
        %s235 = scalar_lea.vmem [#allocation7], %s234
        %s236 = sadd.s32 %s26, %s27
        %p237 = scmp.lt.s32.totalorder %s236, 0
        %s238 = scalar_select %p237, %s236, 0
        %s239 = smul.u32 2, %s238
        %s240 = sadd.s32 %s26, %s27
        %p241 = scmp.lt.s32.totalorder %s240, 0
        %s242 = scalar_select %p241, %s240, 0
        %s243 = smul.u32 2, %s242
        %p244 = scmp.eq.s32.totalorder %s27, 0
        // Predicated region
        $region37: #{tpu_custom_call.1} parent=27 // pred_check
          %p245 = pneg %p244
        $region38: #{tpu_custom_call.1} parent=27 // pred_check_branch
          %247 = sbr.rel (%p245) target = $region40
        $region39: #{tpu_custom_call.1} parent=27 // pred_region
          %248 = vst [vmem:[%s235] sm:$0xff] 0.0
          %249 = vst [vmem:[%s235 + $0x8] sm:$0xff] 0.0
        $region40: #{tpu_custom_call.1} parent=27 // pred_fallthru
          _
        %v250 = vld [vmem:[%s199] sm:$0xff]
        %v251 = vld [vmem:[%s199 + $0x8] sm:$0xff]
        %v252 = vld [vmem:[%s209] sm:$0xff]
        %v253 = vld [vmem:[%s209 + $0x8] sm:$0xff]
        %s254 = sadd.s32 %s26, %s27
        %s255 = smul.u32 %s254, 16
        %v256 = vlaneseq
        %v257 = vshrl.u32 %v256, 7
        %v258 = vadd.s32 %v257, 8
        %v259 = vstv %s255
        %v260 = vadd.s32 %v257, %v259
        %v261 = vadd.s32 %v258, %v259
        %vm262 = vcmp.lt.s32.totalorder %v260, 16
        %vm263 = vcmp.lt.s32.totalorder %v261, 16
        %v264 = vsel %vm262, %v250, 0.0
        %v265 = vsel %vm263, %v251, 0.0
        %v266 = vsel %vm262, %v252, 0.0
        %v267 = vsel %vm263, %v253, 0.0
        %v268 = vmul.f32 %v264, %v266
        %v269 = vmul.f32 %v265, %v267
        %v270 = vadd.f32 %v268, %v269
        %v271 = vadd.f32 %v264, %v266
        %v272 = vadd.f32 %v265, %v267
        %v273 = vadd.f32 %v271, %v272
        %v274 = vld [vmem:[%s235] sm:$0xff]
        %v275 = vadd.f32 %v274, %v270
        %276 = vst [vmem:[%s235] sm:$0xff] %v275
        %s277 = scalar_lea.vmem %s235, 8 [#allocation7]
        %v278 = vld [vmem:[%s277] sm:$0xff]
        %v279 = vadd.f32 %v278, %v273
        %280 = vst [vmem:[%s277] sm:$0xff] %v279
        %s281 = sand.u32 %s106, 1
        %s282 = scalar_lea.sflag [#allocation4], %s281
        %s283 = sand.u32 %s106, 1
        %s284 = smul.addr %s283, 16
        %s285 = scalar_lea.vmem [#allocation7], %s284
        // Predicated region
        $region41: #{tpu_custom_call.1} parent=27 // pred_check
          %p286 = pneg %p116
        $region42: #{tpu_custom_call.1} parent=27 // pred_check_branch
          %288 = sbr.rel (%p286) target = $region44
        $region43: #{tpu_custom_call.1} parent=27 // pred_region
          %290 = vsyncadd %s282, 0
          %s291 = smul.addr %s26, 2
          %s292 = smul.addr %s291, 8
          %s293 = scalar_lea.hbm %s2, %s292
          %s294 = sshll.u32 %s285, 4
          %s295 = int_to_ptr.vmem [resolvable:$true] %s294
          %s296 = sshll.u32 %s293, 4
          %s297 = int_to_ptr.hbm [resolvable:$true] %s296
          %302 = dma.vmem_to_hbm [thread:$0]  %s295, 256, %s297, %s282, 128, 128, 8
        $region44: #{tpu_custom_call.1} parent=27 // pred_fallthru
          _
      $region28: #{tpu_custom_call.1} parent=5 // pred_fallthru
        _
      %p303 = scmp.le.s32.totalorder 2, %s17
      // Predicated region
      $region45: #{tpu_custom_call.1} parent=5 // pred_check
        %p304 = pneg %p303
      $region46: #{tpu_custom_call.1} parent=5 // pred_check_branch
        %306 = sbr.rel (%p304) target = $region48
      $region47: #{tpu_custom_call.1} parent=5 // pred_region
        %s307 = ssub.s32 %s17, 2
        // Predicated region
        $region49: #{tpu_custom_call.1} parent=47 // pred_check
          %p308 = pneg %p122
        $region50: #{tpu_custom_call.1} parent=47 // pred_check_branch
          %310 = sbr.rel (%p308) target = $region52
        $region51: #{tpu_custom_call.1} parent=47 // pred_region
          %s311 = sand.u32 %s107, 1
          %s312 = scalar_lea.sflag [#allocation4], %s311
          %s313 = sand.u32 %s107, 1
          %s314 = smul.addr %s313, 16
          %s315 = scalar_lea.vmem [#allocation7], %s314
          %317 = dma.done %s312, 256
        $region52: #{tpu_custom_call.1} parent=47 // pred_fallthru
          _
      $region48: #{tpu_custom_call.1} parent=5 // pred_fallthru
        _
    $region6: #{tpu_custom_call.1} parent=1 // loop_footer
      %s21 = sadd.s32 1, %s17
    $region7: #{tpu_custom_call.1} parent=1 // loop_footer_branch
      %16 = sbr.rel target = $region3
    $region8: #{tpu_custom_call.1} parent=1 // loop_exit
      _
    %318 = vsyncpa [#allocation3], 1
    %s319 = scalar_lea.sflag [#allocation3], 1
    %320 = vsyncpa %s319, 1
    %321 = vsyncpa [#allocation6], 1
    %s322 = scalar_lea.sflag [#allocation6], 1
    %323 = vsyncpa %s322, 1
    %324 = vsyncpa [#allocation4], 1
    %s325 = scalar_lea.sflag [#allocation4], 1
    %326 = vsyncpa %s325, 1

</llo_original>
